<compile_context>
chip_gen: v6e
topology: v6e:2x2x1
jax: 0.10.0
libtpu: 0.0.40
codegen_flags: <defaults>
</compile_context>

<pallas_src>
import jax
import jax.numpy as jnp
from jax.experimental import pallas as pl
from jax.experimental.pallas import tpu as pltpu


_LANES = 128

# Inputs smaller than this go straight to jnp.maximum: the custom-call launch
# and single-step pipeline overhead cannot be amortized.
_FAST_PATH_BYTES = 1 * 1024 * 1024

# Explicit scoped-VMEM budget for the pallas_call: comfortably under v7x's
# 64 MiB *physical* per-TC VMEM (v5e/v6e have 128 MiB physical) and above
# v5e's 16 MiB scoped default so large blocks still compile everywhere.
_VMEM_LIMIT_BYTES = 40 * 1024 * 1024


def _relu_kernel(x_ref, o_ref):
    # Pure VPU elementwise max against an immediate zero (no zero tile
    # materialized).  Per block the in-core work (~0.5 us) is fully hidden
    # under 1.3-14 us of DMA on every generation, so no deeper pipelining or
    # compute-side tricks are used.
    o_ref[...] = jnp.maximum(x_ref[...], 0)


def _sublane_multiple(dtype) -> int:
    """Sublane tiling multiple: 8 for 4-byte, 16 for 2-byte, 32 for 1-byte."""
    itemsize = jnp.dtype(dtype).itemsize
    return max(8, 32 // max(1, itemsize))


def _default_block_bytes() -> int:
    """Per-step block size, generation-aware.

    v5e (~0.8 TB/s) / v6e (~1.35 TB/s): 4 MiB blocks keep the ~0.35 us
    per-grid-step overhead at a few percent of step time.  v7x-class chips
    (3.2 TB/s HBM, 64 MiB VMEM) need ~8 MiB blocks for the same ratio; that
    is 4x8 = 32 MiB resident, still only half of physical VMEM.
    """
    try:
        info = pltpu.get_tpu_info()
        vmem = getattr(info, "vmem_capacity_bytes", None)
        if vmem is not None and vmem <= 80 * 1024 * 1024:
            return 8 * 1024 * 1024  # small-VMEM / high-bandwidth (v7x-class)
    except Exception:
        pass
    return 4 * 1024 * 1024


def _dimension_semantics():
    """Shard the grid across TensorCores when the chip has more than one.

    On single-TC v5e/v6e plain "parallel" is used (measured no-op vs
    "arbitrary").  On multi-TC chips (v7x) CORE_PARALLEL actually splits the
    grid across the cores, doubling DMA issue capability.
    """
    cores = 1
    try:
        info = pltpu.get_tpu_info()
        for attr in ("num_cores", "core_count", "num_tensorcores",
                     "tensorcores_per_chip"):
            v = getattr(info, attr, None)
            if isinstance(v, int) and v > 1:
                cores = v
                break
    except Exception:
        pass
    if cores > 1:
        return (pltpu.CORE_PARALLEL,)
    return ("parallel",)


def pim_relu(
    x: jax.Array,
    *,
    block_bytes: int | None = None,
    min_pallas_bytes: int = _FAST_PATH_BYTES,
    in_place: bool = False,
) -> jax.Array:
    """ReLU via a Pallas TPU kernel.  Accepts any shape / numeric dtype.

    Args:
      x: input array.
      block_bytes: per-grid-step tile size in bytes (default: generation-aware).
      min_pallas_bytes: below this total byte size, fall back to jnp.maximum.
      in_place: alias the output onto the input HBM buffer.  Only enable when
        the caller donates `x` (e.g. jit donate_argnums) and never reuses it;
        otherwise XLA inserts a defensive full-tensor copy that costs more
        than the alias saves.
    """
    orig_shape = x.shape
    dtype = x.dtype
    itemsize = jnp.dtype(dtype).itemsize
    n = int(x.size)

    if n == 0:
        return x
    if n * itemsize < min_pallas_bytes:
        # Small-input fast path: XLA's fused elementwise is already optimal.
        return jnp.maximum(x, 0)

    sub = _sublane_multiple(dtype)
    if block_bytes is None:
        block_bytes = _default_block_bytes()

    # Lane-dense (rows, 128) slab.  Padding is only needed for truly ragged
    # sizes (n % 128 != 0).
    rows = pl.cdiv(n, _LANES)
    pad = rows * _LANES - n

    # Row-block: ~block_bytes per tile, rounded down to the sublane multiple
    # so interior blocks tile as (8/16/32*k, 128).  The final grid block may
    # be partial: Pallas bounds the DMA and masks the writes, so the slab is
    # NOT rounded up to a block multiple (no extra HBM pad pass).
    brows = max(sub, block_bytes // (_LANES * itemsize))
    brows = (brows // sub) * sub
    if brows >= rows:
        brows = rows  # single full-extent block (always a legal block shape)

    x_flat = jnp.ravel(x)
    if pad > 0:
        # TODO(synk): a partial last block + in-kernel mask would avoid this
        # extra HBM pass; for typical conv activations pad == 0 and this path
        # is never taken.
        x_flat = jnp.pad(x_flat, (0, pad))
    x2d = x_flat.reshape(rows, _LANES)

    grid = (pl.cdiv(rows, brows),)

    # Alias the output onto the input only when the slab is a wrapper-local
    # temporary (pad path) or the caller explicitly opted in.
    aliases = {0: 0} if (in_place or pad > 0) else {}

    out2d = pl.pallas_call(
        _relu_kernel,
        out_shape=jax.ShapeDtypeStruct((rows, _LANES), dtype),
        grid_spec=pltpu.PrefetchScalarGridSpec(
            num_scalar_prefetch=0,
            grid=grid,
            in_specs=[pl.BlockSpec((brows, _LANES), lambda i: (i, 0))],
            out_specs=pl.BlockSpec((brows, _LANES), lambda i: (i, 0)),
        ),
        compiler_params=pltpu.CompilerParams(
            dimension_semantics=_dimension_semantics(),
            vmem_limit_bytes=_VMEM_LIMIT_BYTES,
        ),
        input_output_aliases=aliases,
        # Purely memory-bound: ~1 flop/elem, 2 full-slab HBM passes (padded).
        cost_estimate=pl.CostEstimate(
            flops=n,
            transcendentals=0,
            bytes_accessed=2 * rows * _LANES * itemsize,
        ),
    )(x2d)

    if pad > 0:
        out2d = out2d.reshape(-1)[:n]
    return out2d.reshape(orig_shape)


if __name__ == "__main__":
    key = jax.random.PRNGKey(0)

    # Primary test: small NCHW input consistent with a conv-style activation.
    x = jax.random.normal(key, (2, 4, 16, 16), dtype=jnp.float32)
    ref = jnp.maximum(x, 0.0)

    # Force the Pallas path even at this small size (default would take the
    # jnp fast path below the 1 MiB threshold).
    y = jax.block_until_ready(pim_relu(x, min_pallas_bytes=0))
    assert y.shape == x.shape and y.dtype == x.dtype
    assert bool(jnp.array_equal(y, ref)), "mismatch vs reference ReLU (f32)"

    # Default call exercises the small-input fast path; same semantics.
    y_fast = jax.block_until_ready(pim_relu(x))
    assert bool(jnp.array_equal(y_fast, ref)), "mismatch (fast path)"

    # bf16 path (16-sublane packed tiling).
    xb = x.astype(jnp.bfloat16)
    yb = jax.block_until_ready(pim_relu(xb, min_pallas_bytes=0))
    assert yb.dtype == jnp.bfloat16
    assert bool(jnp.array_equal(yb, jnp.maximum(xb, 0))), "mismatch (bf16)"

    # Ragged size (n % 128 != 0) exercising the padded fallback path.
    xr = jax.random.normal(jax.random.PRNGKey(1), (3, 5, 7), dtype=jnp.float32)
    yr = jax.block_until_ready(pim_relu(xr, min_pallas_bytes=0))
    assert bool(jnp.array_equal(yr, jnp.maximum(xr, 0.0))), "mismatch (ragged)"

    # Row count not a multiple of the block -> partial final grid block,
    # no pad copy (small block_bytes to force a multi-step grid).
    xp = jax.random.normal(jax.random.PRNGKey(2), (2, 3, 40, 128),
                           dtype=jnp.float32)
    yp = jax.block_until_ready(
        pim_relu(xp, min_pallas_bytes=0, block_bytes=64 * 1024))
    assert bool(jnp.array_equal(yp, jnp.maximum(xp, 0.0))), "mismatch (partial)"

    print("KERNEL_OK")
</pallas_src>

<mosaic_0001>
module attributes {stable_mosaic.version = 11 : i64} {
  func.func @_relu_kernel(%arg0: i32, %arg1: memref<16x128xf32, #tpu.memory_space<vmem>>, %arg2: memref<16x128xf32, #tpu.memory_space<vmem>>) attributes {dimension_semantics = [#tpu.dimension_semantics<parallel>], iteration_bounds = array<i64: 1>, scalar_prefetch = 0 : i64, scratch_operands = 0 : i64, tpu.core_type = #tpu.core_type<tc>, window_params = [{transform_indices = @transform_0, window_bounds = array<i64: 16, 128>}, {transform_indices = @transform_1, window_bounds = array<i64: 16, 128>}]} {
    %c0 = arith.constant 0 : index
    %c0_0 = arith.constant 0 : index
    %0 = vector.load %arg1[%c0, %c0_0] : memref<16x128xf32, #tpu.memory_space<vmem>>, vector<16x128xf32>
    %cst = arith.constant 0.000000e+00 : f32
    %1 = vector.broadcast %cst : f32 to vector<16x128xf32>
    %2 = arith.maximumf %0, %1 : vector<16x128xf32>
    %c0_1 = arith.constant 0 : index
    %c0_2 = arith.constant 0 : index
    %3 = vector.load %arg2[%c0_1, %c0_2] : memref<16x128xf32, #tpu.memory_space<vmem>>, vector<16x128xf32>
    tpu.vector_store %arg2[%c0_1, %c0_2], %2 {strides = array<i32>} : memref<16x128xf32, #tpu.memory_space<vmem>>, vector<16x128xf32>,
    return
  }
  func.func @transform_0(%arg0: i32) -> (i32, i32) {
    %c0_i32 = arith.constant 0 : i32
    %c0_i32_0 = arith.constant 0 : i32
    return %arg0, %c0_i32 : i32, i32
  }
  func.func @transform_1(%arg0: i32) -> (i32, i32) {
    %c0_i32 = arith.constant 0 : i32
    %c0_i32_0 = arith.constant 0 : i32
    return %arg0, %c0_i32 : i32, i32
  }
}

</mosaic_0001>

<llo_original>
// kernel: tpu_custom_call.1
$region0: #{tpu_custom_call.1}
  #allocation0 [shape = 'u32[]', space=smem, size = 0x4, offset = 0x4, fixed_abs, tag = 'smem constant byte address 0x4 - core index']
  #allocation1 [shape = 'u32[144,128]{1,0:T(1,128)}', space=vmem, size = 0x12000, scoped, tag = 'internal scratch']
  %s0 = inlined_call_operand.hbm [shape: f32[16,128], index: 0, kind: input, shape index: {}]
  %s1 = inlined_call_operand.hbm [shape: f32[16,128], index: 1, kind: output, shape index: {}]
  %s2 = sld [smem:[#allocation0]]
  $region18: #{tpu_custom_call.1} parent=0
    _
  %s4 = ssub.s32 1, %s2
  %s5 = scalar_select 0, %s4, %s2
  $region1: #{tpu_custom_call.1} parent=0
    #allocation2 [shape = 'u8[8192]{0}', space=vmem, size = 0x2000, scoped, tag = 'input window, operand 0, single buffered']
    #allocation3 [shape = 's32[1]{0}', space=sflag, size = 0x4, scoped, tag = 'scoped memory for tpu_custom_call.1']
    #allocation4 [shape = 's32[1]{0}', space=sflag, size = 0x4, scoped, tag = 'scoped memory for tpu_custom_call.1']
    #allocation5 [shape = 'u8[8192]{0}', space=vmem, size = 0x2000, scoped, tag = 'output window, operand 0, single buffered']
    %6 = vsyncpa [#allocation3], 0
    %7 = vsyncpa [#allocation4], 0
    // Predicated region
    $region2: #{tpu_custom_call.1} parent=1 // pred_check
      _
    $region3: #{tpu_custom_call.1} parent=1 // pred_check_branch
      %9 = sbr.rel (0) target = $region5
    $region4: #{tpu_custom_call.1} parent=1 // pred_region
      %s11 = ssub.s32 256, 256
      %12 = vsyncadd [#allocation3], %s11
      %s13 = sshll.u32 [#allocation2], 4
      %s14 = int_to_ptr.vmem [resolvable:$true] %s13
      %19 = dma.hbm_to_vmem [thread:$0]  %s0, 256, %s14, [#allocation3], 128, 128, 8
    $region5: #{tpu_custom_call.1} parent=1 // pred_fallthru
      _
    // Predicated region
    $region6: #{tpu_custom_call.1} parent=1 // pred_check
      _
    $region7: #{tpu_custom_call.1} parent=1 // pred_check_branch
      %21 = sbr.rel (0) target = $region9
    $region8: #{tpu_custom_call.1} parent=1 // pred_region
      %22 = dma.done [#allocation3], 256
    $region9: #{tpu_custom_call.1} parent=1 // pred_fallthru
      _
    %v23 = vld [vmem:[#allocation2] sm:$0xff]
    %v24 = vld [vmem:[#allocation2 + $0x8] sm:$0xff]
    %v25 = vmax.f32 %v23, 0.0
    %v26 = vmax.f32 %v24, 0.0
    %27 = vst [vmem:[#allocation5] sm:$0xff] %v25
    %28 = vst [vmem:[#allocation5 + $0x8] sm:$0xff] %v26
    // Predicated region
    $region10: #{tpu_custom_call.1} parent=1 // pred_check
      _
    $region11: #{tpu_custom_call.1} parent=1 // pred_check_branch
      %30 = sbr.rel (0) target = $region13
    $region12: #{tpu_custom_call.1} parent=1 // pred_region
      %s32 = ssub.s32 256, 256
      %33 = vsyncadd [#allocation4], %s32
      %s34 = sshll.u32 [#allocation5], 4
      %s35 = int_to_ptr.vmem [resolvable:$true] %s34
      %40 = dma.vmem_to_hbm [thread:$0]  %s35, 256, %s1, [#allocation4], 128, 128, 8
    $region13: #{tpu_custom_call.1} parent=1 // pred_fallthru
      _
    // Predicated region
    $region14: #{tpu_custom_call.1} parent=1 // pred_check
      _
    $region15: #{tpu_custom_call.1} parent=1 // pred_check_branch
      %42 = sbr.rel (0) target = $region17
    $region16: #{tpu_custom_call.1} parent=1 // pred_region
      %43 = dma.done [#allocation4], 256
    $region17: #{tpu_custom_call.1} parent=1 // pred_fallthru
      _
    %44 = vsyncpa [#allocation3], 1
    %45 = vsyncpa [#allocation4], 1

</llo_original>
